<compile_context>
chip_gen: v6e
topology: v6e:2x2x1
jax: 0.10.0
libtpu: 0.0.40
codegen_flags: <defaults>
</compile_context>

<pallas_src>
import functools
import math

import jax
import jax.numpy as jnp
from jax.experimental import pallas as pl
from jax.experimental.pallas import tpu as pltpu

_F32 = jnp.float32
_HIGHEST = jax.lax.Precision.HIGHEST


def _mha_collapsed_kernel(x_ref, mats_ref, bo_ref, o_ref, *, eps):
    """GroupNorm + collapsed attention + both 1x1 convs + residual.

    x_ref    : (Rb, D)     input rows (Nb samples x C channels), input dtype
    mats_ref : (2, Rb, Rb) f32 constants:
                 [0] seg_g  = [same GN group] / (group_size * D)
                 [1] m_fold = rowsum(W_o)[i] * (colsum(W_v)*ln_w)[j] * [same sample]
    bo_ref   : (Rb, 1)     f32 folded bias per row
    o_ref    : (Rb, D)     output rows, same dtype as x (HBM buffer aliased with x)
    """
    x = x_ref[...].astype(_F32)                           # (Rb, D)
    seg_g = mats_ref[0]                                   # (Rb, Rb)
    m_fold = mats_ref[1]                                  # (Rb, Rb)

    # GroupNorm, two-pass variance.  Per-group reduce + broadcast-back is a
    # single block-diagonal matmul (MXU) instead of masked VALU/XLU loops.
    row_sum = jnp.sum(x, axis=1, keepdims=True)           # (Rb, 1) lane reduce
    mu = jnp.dot(seg_g, row_sum,
                 preferred_element_type=_F32, precision=_HIGHEST)   # (Rb, 1)
    xc = x - mu                                           # (Rb, D)
    row_sq = jnp.sum(xc * xc, axis=1, keepdims=True)      # (Rb, 1)
    var = jnp.dot(seg_g, row_sq,
                  preferred_element_type=_F32, precision=_HIGHEST)  # (Rb, 1)
    xhat = xc * jax.lax.rsqrt(var + eps)                  # (Rb, D)

    # Collapsed attention + V-conv + O-conv: one block-diagonal matmul.
    delta = jnp.dot(m_fold, xhat,
                    preferred_element_type=_F32, precision=_HIGHEST)  # (Rb, D)
    o_ref[...] = (x + delta + bo_ref[...]).astype(o_ref.dtype)


def _pick_block_batch(N, C, D, itemsize):
    """Largest per-block batch Nb (divisor of N) giving a sublane-aligned,
    VMEM-bounded block; prefers >= 2 grid steps (v7x megacore) when the block
    stays large enough to amortize per-step overhead."""
    ROW_CAP = 512              # bounds the O(Rb^2) folded matrices
    BYTE_CAP = 2 << 20         # ~2 MiB x-block; double-buffered in+out fits v7x VMEM

    def ok(nb):
        rb = nb * C
        return (rb <= ROW_CAP and rb * D * itemsize <= BYTE_CAP
                and (rb % 8 == 0 or nb == N))

    cands = [d for d in range(1, N + 1) if N % d == 0 and ok(d)]
    if cands:
        nb = max(cands)
        if nb == N:            # expose >= 2 grid steps for the 2 v7x TensorCores
            for d in sorted(cands, reverse=True):
                if d < N and d * C * D * itemsize >= (512 << 10):
                    return d
        return nb
    # Caps unsatisfiable: smallest sublane-legal block, else whole batch.
    for d in range(1, N + 1):
        if N % d == 0 and (d * C) % 8 == 0:
            return d
    return N


@functools.partial(jax.jit, static_argnames=("resolution", "spatial", "eps"))
def multihead_attn(x_nchw, ln_w, ln_b, w_kqv, b_kqv, w_o, b_o,
                   *, resolution=16, spatial=False, eps=1e-5):
    assert spatial is False, "spatial=True path not implemented"
    N, C, H, W = x_nchw.shape
    assert resolution >= H and resolution >= W, "multi-patch path not implemented"
    D = H * W
    num_groups = C // 4 if C > 4 else 1
    gsz = C // num_groups

    in_dtype = x_nchw.dtype
    itemsize = jnp.dtype(in_dtype).itemsize
    Nb = _pick_block_batch(N, C, D, itemsize)
    Rb = Nb * C

    # HBM boundary stays in the input dtype (halves traffic for bf16 inputs).
    x2 = x_nchw.reshape(N * C, D)

    # --- Fold the (degenerate) attention + both 1x1 convs + GN affine into
    #     per-channel vectors (hoisted to init time in a real model; here it is
    #     a handful of tiny XLA ops fused under this jit).
    wkqv = w_kqv.reshape(3 * C, C).astype(_F32)
    bkqv = b_kqv.reshape(3 * C).astype(_F32)
    w_v, b_v = wkqv[2 * C:], bkqv[2 * C:]
    wv_red = jnp.sum(w_v, axis=0)                               # colsum(W_v), (C,)
    bv_red = jnp.sum(b_v)                                       # sum(b_v)
    wo_red = jnp.sum(w_o.reshape(C, C).astype(_F32), axis=1)    # rowsum(W_o), (C,)
    a = wv_red * ln_w.astype(_F32)                              # fold GN scale
    const = jnp.sum(wv_red * ln_b.astype(_F32)) + bv_red        # fold GN shift + b_v
    bo_eff = wo_red * const + b_o.astype(_F32)                  # (C,)

    # --- Block-diagonal constant matrices (per-block row pattern repeats).
    rows = jnp.arange(Rb)
    ch = rows % C
    smp = rows // C
    grp = rows // gsz
    seg_g = (grp[:, None] == grp[None, :]).astype(_F32) / float(gsz * D)
    m_fold = (smp[:, None] == smp[None, :]).astype(_F32) \
        * (wo_red[ch][:, None] * a[ch][None, :])
    mats = jnp.stack([seg_g, m_fold], axis=0)                   # (2, Rb, Rb) f32
    bo_rows = bo_eff[ch].reshape(Rb, 1)                         # (Rb, 1) f32

    kernel = functools.partial(_mha_collapsed_kernel, eps=float(eps))

    # VMEM budget: double-buffered x-in + aliased out + constant mats + bias.
    x_bytes = Rb * D * itemsize
    mats_bytes = 2 * Rb * Rb * 4
    vmem_need = 4 * x_bytes + 2 * mats_bytes + 2 * Rb * 128 * 4 + (2 << 20)
    vmem_limit = int(min(max(vmem_need, 8 << 20), 32 << 20))

    out2 = pl.pallas_call(
        kernel,
        out_shape=jax.ShapeDtypeStruct((N * C, D), in_dtype),
        grid_spec=pltpu.PrefetchScalarGridSpec(
            num_scalar_prefetch=0,
            grid=(N // Nb,),
            in_specs=[
                pl.BlockSpec((Rb, D), lambda i: (i, 0)),        # x rows
                pl.BlockSpec((2, Rb, Rb), lambda i: (0, 0, 0)),  # constant matrices
                pl.BlockSpec((Rb, 1), lambda i: (0, 0)),        # folded bias column
            ],
            out_specs=pl.BlockSpec((Rb, D), lambda i: (i, 0)),
        ),
        input_output_aliases={0: 0},                            # out = x + delta, in place
        compiler_params=pltpu.CompilerParams(
            dimension_semantics=("parallel",),
            vmem_limit_bytes=vmem_limit),
    )(x2, mats, bo_rows)
    return out2.reshape(N, C, H, W)


def ref_forward(x, ln_w, ln_b, w_kqv, b_kqv, w_o, b_o, eps=1e-5):
    """Plain-JAX mirror of the PyTorch forward (spatial=False, single patch),
    including the original degenerate einsum."""
    N, C, H, W = x.shape
    D = H * W
    num_groups = C // 4 if C > 4 else 1
    norm_factor = 1.0 / math.sqrt(C)
    res = x
    xg = x.reshape(N, num_groups, (C // num_groups) * D)
    mu = xg.mean(-1, keepdims=True)
    var = xg.var(-1, keepdims=True)
    xn = ((xg - mu) / jnp.sqrt(var + eps)).reshape(N, C, H, W)
    xn = xn * ln_w[None, :, None, None] + ln_b[None, :, None, None]
    kqv = jnp.einsum('oc,nchw->nohw', w_kqv.reshape(3 * C, C), xn,
                     precision='highest') + b_kqv[None, :, None, None]
    K, Q, V = kqv[:, :C], kqv[:, C:2 * C], kqv[:, 2 * C:]
    Kf = K.reshape(N, 1, C, D)
    Qf = Q.reshape(N, 1, C, D)
    Vf = V.reshape(N, 1, C, D)
    S = jnp.einsum('nhcd,nhed->nhce', Qf, Kf, precision='highest') * norm_factor
    A = jax.nn.softmax(S, axis=-1)
    out = jnp.einsum('nhce,nhfd->nhcd', A, Vf, precision='highest')  # degenerate on purpose
    out = out.reshape(N, C, H, W)
    out = jnp.einsum('oc,nchw->nohw', w_o.reshape(C, C), out,
                     precision='highest') + b_o[None, :, None, None]
    return out + res


if __name__ == "__main__":
    N, C, H, W = 2, 4, 16, 16          # inCh=4, resolution=16, spatial=False
    key = jax.random.PRNGKey(0)
    kx, k1, k2, k3, k4, k5, k6 = jax.random.split(key, 7)

    x = jax.random.normal(kx, (N, C, H, W), dtype=jnp.float32)
    ln_w = 1.0 + 0.1 * jax.random.normal(k1, (C,), dtype=jnp.float32)
    ln_b = 0.1 * jax.random.normal(k2, (C,), dtype=jnp.float32)
    w_kqv = 0.2 * jax.random.normal(k3, (3 * C, C, 1, 1), dtype=jnp.float32)
    b_kqv = 0.1 * jax.random.normal(k4, (3 * C,), dtype=jnp.float32)
    w_o = 0.2 * jax.random.normal(k5, (C, C, 1, 1), dtype=jnp.float32)
    b_o = 0.1 * jax.random.normal(k6, (C,), dtype=jnp.float32)

    out = multihead_attn(x, ln_w, ln_b, w_kqv, b_kqv, w_o, b_o,
                         resolution=16, spatial=False)
    out = jax.block_until_ready(out)

    ref = ref_forward(x, ln_w, ln_b, w_kqv, b_kqv, w_o, b_o)
    assert out.shape == (N, C, H, W)
    assert jnp.allclose(out, ref, rtol=1e-4, atol=1e-4), \
        f"max abs err {jnp.max(jnp.abs(out - ref))}"
    print("KERNEL_OK")
</pallas_src>

<mosaic_0001>
module attributes {stable_mosaic.version = 11 : i64} {
  func.func @_mha_collapsed_kernel(%arg0: i32, %arg1: memref<8x256xf32, #tpu.memory_space<vmem>>, %arg2: memref<2x8x8xf32, #tpu.memory_space<vmem>>, %arg3: memref<8x1xf32, #tpu.memory_space<vmem>>, %arg4: memref<8x256xf32, #tpu.memory_space<vmem>>) attributes {dimension_semantics = [#tpu.dimension_semantics<parallel>], iteration_bounds = array<i64: 1>, scalar_prefetch = 0 : i64, scratch_operands = 0 : i64, tpu.core_type = #tpu.core_type<tc>, window_params = [{transform_indices = @transform_0, window_bounds = array<i64: 8, 256>}, {pipeline_mode = #tpu.pipeline_mode<synchronous>, transform_indices = @transform_1, window_bounds = array<i64: 2, 8, 8>}, {pipeline_mode = #tpu.pipeline_mode<synchronous>, transform_indices = @transform_2, window_bounds = array<i64: 8, 1>}, {transform_indices = @transform_3, window_bounds = array<i64: 8, 256>}]} {
    %c0 = arith.constant 0 : index
    %c0_0 = arith.constant 0 : index
    %0 = vector.load %arg1[%c0, %c0_0] : memref<8x256xf32, #tpu.memory_space<vmem>>, vector<8x256xf32>
    %c0_1 = arith.constant 0 : index
    %c0_2 = arith.constant 0 : index
    %c0_3 = arith.constant 0 : index
    %1 = vector.load %arg2[%c0_1, %c0_2, %c0_3] : memref<2x8x8xf32, #tpu.memory_space<vmem>>, vector<1x8x8xf32>
    %2 = vector.shape_cast %1 : vector<1x8x8xf32> to vector<8x8xf32>
    %c1 = arith.constant 1 : index
    %c0_4 = arith.constant 0 : index
    %c0_5 = arith.constant 0 : index
    %3 = vector.load %arg2[%c1, %c0_4, %c0_5] : memref<2x8x8xf32, #tpu.memory_space<vmem>>, vector<1x8x8xf32>
    %4 = vector.shape_cast %3 : vector<1x8x8xf32> to vector<8x8xf32>
    %cst = arith.constant dense<0.000000e+00> : vector<8xf32>
    %5 = vector.multi_reduction <add>, %0, %cst [1] : vector<8x256xf32> to vector<8xf32>
    %6 = vector.shape_cast %5 : vector<8xf32> to vector<8x1xf32>
    %cst_6 = arith.constant dense<0.000000e+00> : vector<8x1xf32>
    %7 = tpu.matmul %2, %6, %cst_6 {dimension_numbers = #tpu.dot_dimension_numbers<[1], [0], [0], [1], [0, 0, 1, 1], [], []>, precision = #tpu.contract_precision<fp32>} : vector<8x8xf32>, vector<8x1xf32>, vector<8x1xf32> -> vector<8x1xf32>
    %8 = vector.broadcast %7 : vector<8x1xf32> to vector<8x256xf32>
    %9 = arith.subf %0, %8 : vector<8x256xf32>
    %10 = arith.mulf %9, %9 : vector<8x256xf32>
    %cst_7 = arith.constant dense<0.000000e+00> : vector<8xf32>
    %11 = vector.multi_reduction <add>, %10, %cst_7 [1] : vector<8x256xf32> to vector<8xf32>
    %12 = vector.shape_cast %11 : vector<8xf32> to vector<8x1xf32>
    %cst_8 = arith.constant dense<0.000000e+00> : vector<8x1xf32>
    %13 = tpu.matmul %2, %12, %cst_8 {dimension_numbers = #tpu.dot_dimension_numbers<[1], [0], [0], [1], [0, 0, 1, 1], [], []>, precision = #tpu.contract_precision<fp32>} : vector<8x8xf32>, vector<8x1xf32>, vector<8x1xf32> -> vector<8x1xf32>
    %cst_9 = arith.constant 9.99999974E-6 : f32
    %14 = vector.broadcast %cst_9 : f32 to vector<8x1xf32>
    %15 = arith.addf %13, %14 : vector<8x1xf32>
    %16 = math.rsqrt %15 : vector<8x1xf32>
    %17 = vector.broadcast %16 : vector<8x1xf32> to vector<8x256xf32>
    %18 = arith.mulf %9, %17 : vector<8x256xf32>
    %cst_10 = arith.constant dense<0.000000e+00> : vector<8x256xf32>
    %19 = tpu.matmul %4, %18, %cst_10 {dimension_numbers = #tpu.dot_dimension_numbers<[1], [0], [0], [1], [0, 0, 1, 1], [], []>, precision = #tpu.contract_precision<fp32>} : vector<8x8xf32>, vector<8x256xf32>, vector<8x256xf32> -> vector<8x256xf32>
    %20 = arith.addf %0, %19 : vector<8x256xf32>
    %c0_11 = arith.constant 0 : index
    %c0_12 = arith.constant 0 : index
    %21 = vector.load %arg3[%c0_11, %c0_12] : memref<8x1xf32, #tpu.memory_space<vmem>>, vector<8x1xf32>
    %22 = vector.broadcast %21 : vector<8x1xf32> to vector<8x256xf32>
    %23 = arith.addf %20, %22 : vector<8x256xf32>
    %c0_13 = arith.constant 0 : index
    %c0_14 = arith.constant 0 : index
    %24 = vector.load %arg4[%c0_13, %c0_14] : memref<8x256xf32, #tpu.memory_space<vmem>>, vector<8x256xf32>
    tpu.vector_store %arg4[%c0_13, %c0_14], %23 {strides = array<i32>} : memref<8x256xf32, #tpu.memory_space<vmem>>, vector<8x256xf32>,
    return
  }
  func.func @transform_0(%arg0: i32) -> (i32, i32) {
    %c0_i32 = arith.constant 0 : i32
    %c0_i32_0 = arith.constant 0 : i32
    return %arg0, %c0_i32 : i32, i32
  }
  func.func @transform_1(%arg0: i32) -> (i32, i32, i32) {
    %c0_i32 = arith.constant 0 : i32
    %c0_i32_0 = arith.constant 0 : i32
    %c0_i32_1 = arith.constant 0 : i32
    %c0_i32_2 = arith.constant 0 : i32
    return %c0_i32, %c0_i32_0, %c0_i32_1 : i32, i32, i32
  }
  func.func @transform_2(%arg0: i32) -> (i32, i32) {
    %c0_i32 = arith.constant 0 : i32
    %c0_i32_0 = arith.constant 0 : i32
    %c0_i32_1 = arith.constant 0 : i32
    return %c0_i32, %c0_i32_0 : i32, i32
  }
  func.func @transform_3(%arg0: i32) -> (i32, i32) {
    %c0_i32 = arith.constant 0 : i32
    %c0_i32_0 = arith.constant 0 : i32
    return %arg0, %c0_i32 : i32, i32
  }
}

</mosaic_0001>

<llo_original>
// kernel: multihead_attn.1
$region0: #{multihead_attn.1}
  #allocation0 [shape = 'u32[]', space=smem, size = 0x4, offset = 0x4, fixed_abs, tag = 'smem constant byte address 0x4 - core index']
  #allocation1 [shape = 'u32[144,128]{1,0:T(1,128)}', space=vmem, size = 0x12000, scoped, tag = 'internal scratch']
  %s0 = inlined_call_operand.vmem [shape: f32[8,256], index: 0, kind: input, shape index: {}, may-alias: {0,3}]
  %s1 = inlined_call_operand.vmem [shape: f32[2,8,8], index: 1, kind: input, shape index: {}]
  %s2 = inlined_call_operand.vmem [shape: f32[8,1], index: 2, kind: input, shape index: {}]
  %s3 = inlined_call_operand.vmem [shape: f32[8,256], index: 3, kind: output, shape index: {}, may-alias: {0,3}]
  %s4 = sld [smem:[#allocation0]]
  $region22: #{multihead_attn.1} parent=0
    _
  %s6 = ssub.s32 1, %s4
  %s7 = scalar_select 0, %s6, %s4
  // Predicated region
  $region2: #{multihead_attn.1} parent=0 // pred_check
    _
  $region3: #{multihead_attn.1} parent=0 // pred_check_branch
    %9 = sbr.rel (0) target = $region5
  $region4: #{multihead_attn.1} parent=0 // pred_region
    _
  $region5: #{multihead_attn.1} parent=0 // pred_fallthru
    _
  // Predicated region
  $region6: #{multihead_attn.1} parent=0 // pred_check
    _
  $region7: #{multihead_attn.1} parent=0 // pred_check_branch
    %11 = sbr.rel (0) target = $region9
  $region8: #{multihead_attn.1} parent=0 // pred_region
    _
  $region9: #{multihead_attn.1} parent=0 // pred_fallthru
    _
  // Predicated region
  $region10: #{multihead_attn.1} parent=0 // pred_check
    _
  $region11: #{multihead_attn.1} parent=0 // pred_check_branch
    %13 = sbr.rel (0) target = $region13
  $region12: #{multihead_attn.1} parent=0 // pred_region
    _
  $region13: #{multihead_attn.1} parent=0 // pred_fallthru
    _
  %v14 = vld [vmem:[%s0] sm:$0xff]
  %v15 = vld [vmem:[%s0 + $0x8] sm:$0xff]
  %v16 = vld [vmem:[%s1] sm:$0xff]
  %s17 = scalar_lea.vmem %s1, 8
  %v18 = vld [vmem:[%s17] sm:$0xff]
  %v19 = vadd.f32 %v14, %v15
  %20 = vadd.xlane.f32.xlu0 %v19
  %v21 = vpop.xlane.xlu0 %20
  %vm22 = vcmask 64512
  %v24 = vsel %vm22, %v16, 0
  %26 = vmatprep.subr.mxu0 0.0
  %27 = vmatpush1.msra.mxu0 0.0
  %28 = vmatprep.subr.mxu0 0.0
  %29 = vmatpush1.msra.mxu0 0.0
  %30 = vmatprep.subr.mxu0 0.0
  %31 = vmatpush1.msra.mxu0 0.0
  %32 = vmatprep.subr.mxu0 0.0
  %33 = vmatpush1.msra.mxu0 0.0
  %34 = vmatprep.subr.mxu0 0.0
  %35 = vmatpush1.msra.mxu0 0.0
  %36 = vmatprep.subr.mxu0 0.0
  %37 = vmatpush1.msra.mxu0 0.0
  %38 = vmatprep.subr.mxu0 0.0
  %39 = vmatpush1.msra.mxu0 0.0
  %40 = vmatprep.subr.mxu0 0.0
  %41 = vmatpush1.msra.mxu0 0.0
  %42 = vmatprep.subr.mxu0 0.0
  %43 = vmatpush1.msra.mxu0 0.0
  %44 = vmatprep.subr.mxu0 0.0
  %45 = vmatpush1.msra.mxu0 0.0
  %46 = vmatprep.subr.mxu0 0.0
  %47 = vmatpush1.msra.mxu0 0.0
  %48 = vmatprep.subr.mxu0 0.0
  %49 = vmatpush1.msra.mxu0 0.0
  %50 = vmatprep.subr.mxu0 0.0
  %51 = vmatpush1.msra.mxu0 0.0
  %52 = vmatprep.subr.mxu0 0.0
  %53 = vmatpush1.msra.mxu0 0.0
  %54 = vmatprep.subr.mxu0 0.0
  %55 = vmatpush1.msra.mxu0 0.0
  %56 = vmatprep.subr.mxu0 0.0
  %v57 = vand.u32 %v21, 4294901760
  %58 = vmatpush1.msra.mxu0 %v57
  %59 = vmatprep.subr.mxu0 0.0
  %60 = vmatpush2.msra.mxu0 0.0
  %61 = vmatprep.subr.mxu0 0.0
  %62 = vmatpush2.msra.mxu0 0.0
  %63 = vmatprep.subr.mxu0 0.0
  %64 = vmatpush2.msra.mxu0 0.0
  %65 = vmatprep.subr.mxu0 0.0
  %66 = vmatpush2.msra.mxu0 0.0
  %67 = vmatprep.subr.mxu0 0.0
  %68 = vmatpush2.msra.mxu0 0.0
  %69 = vmatprep.subr.mxu0 0.0
  %70 = vmatpush2.msra.mxu0 0.0
  %71 = vmatprep.subr.mxu0 0.0
  %72 = vmatpush2.msra.mxu0 0.0
  %73 = vmatprep.subr.mxu0 0.0
  %74 = vmatpush2.msra.mxu0 0.0
  %75 = vmatprep.subr.mxu0 0.0
  %76 = vmatpush2.msra.mxu0 0.0
  %77 = vmatprep.subr.mxu0 0.0
  %78 = vmatpush2.msra.mxu0 0.0
  %79 = vmatprep.subr.mxu0 0.0
  %80 = vmatpush2.msra.mxu0 0.0
  %81 = vmatprep.subr.mxu0 0.0
  %82 = vmatpush2.msra.mxu0 0.0
  %83 = vmatprep.subr.mxu0 0.0
  %84 = vmatpush2.msra.mxu0 0.0
  %85 = vmatprep.subr.mxu0 0.0
  %86 = vmatpush2.msra.mxu0 0.0
  %87 = vmatprep.subr.mxu0 0.0
  %88 = vmatpush2.msra.mxu0 0.0
  %89 = vmatprep.subr.mxu0 0.0
  %90 = vmatpush2.msra.mxu0 0.0
  %91 = vmatprep.mubr.f32.mxu0 0.0
  %v92 = vand.u32 %v24, 4294901760
  %v93 = vsub.f32 %v24, %v92
  %v94 = vand.u32 %v93, 4294901760
  %v95 = vsub.f32 %v93, %v94
  %v96 = vand.u32 %v95, 4294901760
  %97 = vmatmul.mubr.f32.gmra.mxu0 %v96
  %v98 = vpop.f32.mrf.mxu0
  %v99 = vadd.f32 0.0, %v98
  %v100 = vpop.f32.mrf.mxu0
  %101 = vdwg.mxu0
  %102 = vmatprep.subr.mxu0 0.0
  %103 = vmatpush1.msra.mxu0 0.0
  %104 = vmatprep.subr.mxu0 0.0
  %105 = vmatpush1.msra.mxu0 0.0
  %106 = vmatprep.subr.mxu0 0.0
  %107 = vmatpush1.msra.mxu0 0.0
  %108 = vmatprep.subr.mxu0 0.0
  %109 = vmatpush1.msra.mxu0 0.0
  %110 = vmatprep.subr.mxu0 0.0
  %111 = vmatpush1.msra.mxu0 0.0
  %112 = vmatprep.subr.mxu0 0.0
  %113 = vmatpush1.msra.mxu0 0.0
  %114 = vmatprep.subr.mxu0 0.0
  %115 = vmatpush1.msra.mxu0 0.0
  %116 = vmatprep.subr.mxu0 0.0
  %117 = vmatpush1.msra.mxu0 0.0
  %118 = vmatprep.subr.mxu0 0.0
  %119 = vmatpush1.msra.mxu0 0.0
  %120 = vmatprep.subr.mxu0 0.0
  %121 = vmatpush1.msra.mxu0 0.0
  %122 = vmatprep.subr.mxu0 0.0
  %123 = vmatpush1.msra.mxu0 0.0
  %124 = vmatprep.subr.mxu0 0.0
  %125 = vmatpush1.msra.mxu0 0.0
  %126 = vmatprep.subr.mxu0 0.0
  %127 = vmatpush1.msra.mxu0 0.0
  %128 = vmatprep.subr.mxu0 0.0
  %129 = vmatpush1.msra.mxu0 0.0
  %130 = vmatprep.subr.mxu0 0.0
  %131 = vmatpush1.msra.mxu0 0.0
  %132 = vmatprep.subr.mxu0 0.0
  %v133 = vand.u32 %v21, 4294901760
  %v134 = vsub.f32 %v21, %v133
  %v135 = vand.u32 %v134, 4294901760
  %v136 = vsub.f32 %v134, %v135
  %v137 = vand.u32 %v136, 4294901760
  %138 = vmatpush1.msra.mxu0 %v137
  %139 = vmatprep.subr.mxu0 0.0
  %140 = vmatpush2.msra.mxu0 0.0
  %141 = vmatprep.subr.mxu0 0.0
  %142 = vmatpush2.msra.mxu0 0.0
  %143 = vmatprep.subr.mxu0 0.0
  %144 = vmatpush2.msra.mxu0 0.0
  %145 = vmatprep.subr.mxu0 0.0
  %146 = vmatpush2.msra.mxu0 0.0
  %147 = vmatprep.subr.mxu0 0.0
  %148 = vmatpush2.msra.mxu0 0.0
  %149 = vmatprep.subr.mxu0 0.0
  %150 = vmatpush2.msra.mxu0 0.0
  %151 = vmatprep.subr.mxu0 0.0
  %152 = vmatpush2.msra.mxu0 0.0
  %153 = vmatprep.subr.mxu0 0.0
  %154 = vmatpush2.msra.mxu0 0.0
  %155 = vmatprep.subr.mxu0 0.0
  %156 = vmatpush2.msra.mxu0 0.0
  %157 = vmatprep.subr.mxu0 0.0
  %158 = vmatpush2.msra.mxu0 0.0
  %159 = vmatprep.subr.mxu0 0.0
  %160 = vmatpush2.msra.mxu0 0.0
  %161 = vmatprep.subr.mxu0 0.0
  %162 = vmatpush2.msra.mxu0 0.0
  %163 = vmatprep.subr.mxu0 0.0
  %164 = vmatpush2.msra.mxu0 0.0
  %165 = vmatprep.subr.mxu0 0.0
  %166 = vmatpush2.msra.mxu0 0.0
  %167 = vmatprep.subr.mxu0 0.0
  %168 = vmatpush2.msra.mxu0 0.0
  %169 = vmatprep.subr.mxu0 0.0
  %170 = vmatpush2.msra.mxu0 0.0
  %171 = vmatprep.mubr.f32.mxu0 0.0
  %v172 = vand.u32 %v24, 4294901760
  %173 = vmatmul.mubr.f32.gmra.mxu0 %v172
  %v174 = vpop.f32.mrf.mxu0
  %v175 = vadd.f32 %v99, %v174
  %v176 = vpop.f32.mrf.mxu0
  %177 = vdwg.mxu0
  %178 = vmatprep.subr.mxu0 0.0
  %179 = vmatpush1.msra.mxu0 0.0
  %180 = vmatprep.subr.mxu0 0.0
  %181 = vmatpush1.msra.mxu0 0.0
  %182 = vmatprep.subr.mxu0 0.0
  %183 = vmatpush1.msra.mxu0 0.0
  %184 = vmatprep.subr.mxu0 0.0
  %185 = vmatpush1.msra.mxu0 0.0
  %186 = vmatprep.subr.mxu0 0.0
  %187 = vmatpush1.msra.mxu0 0.0
  %188 = vmatprep.subr.mxu0 0.0
  %189 = vmatpush1.msra.mxu0 0.0
  %190 = vmatprep.subr.mxu0 0.0
  %191 = vmatpush1.msra.mxu0 0.0
  %192 = vmatprep.subr.mxu0 0.0
  %193 = vmatpush1.msra.mxu0 0.0
  %194 = vmatprep.subr.mxu0 0.0
  %195 = vmatpush1.msra.mxu0 0.0
  %196 = vmatprep.subr.mxu0 0.0
  %197 = vmatpush1.msra.mxu0 0.0
  %198 = vmatprep.subr.mxu0 0.0
  %199 = vmatpush1.msra.mxu0 0.0
  %200 = vmatprep.subr.mxu0 0.0
  %201 = vmatpush1.msra.mxu0 0.0
  %202 = vmatprep.subr.mxu0 0.0
  %203 = vmatpush1.msra.mxu0 0.0
  %204 = vmatprep.subr.mxu0 0.0
  %205 = vmatpush1.msra.mxu0 0.0
  %206 = vmatprep.subr.mxu0 0.0
  %207 = vmatpush1.msra.mxu0 0.0
  %208 = vmatprep.subr.mxu0 0.0
  %v209 = vand.u32 %v21, 4294901760
  %v210 = vsub.f32 %v21, %v209
  %211 = vmatpush1.msra.mxu0 %v210
  %212 = vmatprep.subr.mxu0 0.0
  %213 = vmatpush2.msra.mxu0 0.0
  %214 = vmatprep.subr.mxu0 0.0
  %215 = vmatpush2.msra.mxu0 0.0
  %216 = vmatprep.subr.mxu0 0.0
  %217 = vmatpush2.msra.mxu0 0.0
  %218 = vmatprep.subr.mxu0 0.0
  %219 = vmatpush2.msra.mxu0 0.0
  %220 = vmatprep.subr.mxu0 0.0
  %221 = vmatpush2.msra.mxu0 0.0
  %222 = vmatprep.subr.mxu0 0.0
  %223 = vmatpush2.msra.mxu0 0.0
  %224 = vmatprep.subr.mxu0 0.0
  %225 = vmatpush2.msra.mxu0 0.0
  %226 = vmatprep.subr.mxu0 0.0
  %227 = vmatpush2.msra.mxu0 0.0
  %228 = vmatprep.subr.mxu0 0.0
  %229 = vmatpush2.msra.mxu0 0.0
  %230 = vmatprep.subr.mxu0 0.0
  %231 = vmatpush2.msra.mxu0 0.0
  %232 = vmatprep.subr.mxu0 0.0
  %233 = vmatpush2.msra.mxu0 0.0
  %234 = vmatprep.subr.mxu0 0.0
  %235 = vmatpush2.msra.mxu0 0.0
  %236 = vmatprep.subr.mxu0 0.0
  %237 = vmatpush2.msra.mxu0 0.0
  %238 = vmatprep.subr.mxu0 0.0
  %239 = vmatpush2.msra.mxu0 0.0
  %240 = vmatprep.subr.mxu0 0.0
  %241 = vmatpush2.msra.mxu0 0.0
  %242 = vmatprep.subr.mxu0 0.0
  %243 = vmatpush2.msra.mxu0 0.0
  %244 = vmatprep.mubr.f32.mxu0 0.0
  %v245 = vand.u32 %v24, 4294901760
  %v246 = vsub.f32 %v24, %v245
  %247 = vmatmul.mubr.f32.gmra.mxu0 %v246
  %v248 = vpop.f32.mrf.mxu0
  %v249 = vadd.f32 %v175, %v248
  %v250 = vpop.f32.mrf.mxu0
  %251 = vdwg.mxu0
  %252 = vmatprep.subr.mxu0 0.0
  %253 = vmatpush1.msra.mxu0 0.0
  %254 = vmatprep.subr.mxu0 0.0
  %255 = vmatpush1.msra.mxu0 0.0
  %256 = vmatprep.subr.mxu0 0.0
  %257 = vmatpush1.msra.mxu0 0.0
  %258 = vmatprep.subr.mxu0 0.0
  %259 = vmatpush1.msra.mxu0 0.0
  %260 = vmatprep.subr.mxu0 0.0
  %261 = vmatpush1.msra.mxu0 0.0
  %262 = vmatprep.subr.mxu0 0.0
  %263 = vmatpush1.msra.mxu0 0.0
  %264 = vmatprep.subr.mxu0 0.0
  %265 = vmatpush1.msra.mxu0 0.0
  %266 = vmatprep.subr.mxu0 0.0
  %267 = vmatpush1.msra.mxu0 0.0
  %268 = vmatprep.subr.mxu0 0.0
  %269 = vmatpush1.msra.mxu0 0.0
  %270 = vmatprep.subr.mxu0 0.0
  %271 = vmatpush1.msra.mxu0 0.0
  %272 = vmatprep.subr.mxu0 0.0
  %273 = vmatpush1.msra.mxu0 0.0
  %274 = vmatprep.subr.mxu0 0.0
  %275 = vmatpush1.msra.mxu0 0.0
  %276 = vmatprep.subr.mxu0 0.0
  %277 = vmatpush1.msra.mxu0 0.0
  %278 = vmatprep.subr.mxu0 0.0
  %279 = vmatpush1.msra.mxu0 0.0
  %280 = vmatprep.subr.mxu0 0.0
  %281 = vmatpush1.msra.mxu0 0.0
  %282 = vmatprep.subr.mxu0 0.0
  %v283 = vand.u32 %v21, 4294901760
  %284 = vmatpush1.msra.mxu0 %v283
  %285 = vmatprep.subr.mxu0 0.0
  %286 = vmatpush2.msra.mxu0 0.0
  %287 = vmatprep.subr.mxu0 0.0
  %288 = vmatpush2.msra.mxu0 0.0
  %289 = vmatprep.subr.mxu0 0.0
  %290 = vmatpush2.msra.mxu0 0.0
  %291 = vmatprep.subr.mxu0 0.0
  %292 = vmatpush2.msra.mxu0 0.0
  %293 = vmatprep.subr.mxu0 0.0
  %294 = vmatpush2.msra.mxu0 0.0
  %295 = vmatprep.subr.mxu0 0.0
  %296 = vmatpush2.msra.mxu0 0.0
  %297 = vmatprep.subr.mxu0 0.0
  %298 = vmatpush2.msra.mxu0 0.0
  %299 = vmatprep.subr.mxu0 0.0
  %300 = vmatpush2.msra.mxu0 0.0
  %301 = vmatprep.subr.mxu0 0.0
  %302 = vmatpush2.msra.mxu0 0.0
  %303 = vmatprep.subr.mxu0 0.0
  %304 = vmatpush2.msra.mxu0 0.0
  %305 = vmatprep.subr.mxu0 0.0
  %306 = vmatpush2.msra.mxu0 0.0
  %307 = vmatprep.subr.mxu0 0.0
  %308 = vmatpush2.msra.mxu0 0.0
  %309 = vmatprep.subr.mxu0 0.0
  %310 = vmatpush2.msra.mxu0 0.0
  %311 = vmatprep.subr.mxu0 0.0
  %312 = vmatpush2.msra.mxu0 0.0
  %313 = vmatprep.subr.mxu0 0.0
  %314 = vmatpush2.msra.mxu0 0.0
  %315 = vmatprep.subr.mxu0 0.0
  %316 = vmatpush2.msra.mxu0 0.0
  %317 = vmatprep.mubr.f32.mxu0 0.0
  %v318 = vand.u32 %v24, 4294901760
  %v319 = vsub.f32 %v24, %v318
  %v320 = vand.u32 %v319, 4294901760
  %321 = vmatmul.mubr.f32.gmra.mxu0 %v320
  %v322 = vpop.f32.mrf.mxu0
  %v323 = vadd.f32 %v249, %v322
  %v324 = vpop.f32.mrf.mxu0
  %325 = vdwg.mxu0
  %326 = vmatprep.subr.mxu0 0.0
  %327 = vmatpush1.msra.mxu0 0.0
  %328 = vmatprep.subr.mxu0 0.0
  %329 = vmatpush1.msra.mxu0 0.0
  %330 = vmatprep.subr.mxu0 0.0
  %331 = vmatpush1.msra.mxu0 0.0
  %332 = vmatprep.subr.mxu0 0.0
  %333 = vmatpush1.msra.mxu0 0.0
  %334 = vmatprep.subr.mxu0 0.0
  %335 = vmatpush1.msra.mxu0 0.0
  %336 = vmatprep.subr.mxu0 0.0
  %337 = vmatpush1.msra.mxu0 0.0
  %338 = vmatprep.subr.mxu0 0.0
  %339 = vmatpush1.msra.mxu0 0.0
  %340 = vmatprep.subr.mxu0 0.0
  %341 = vmatpush1.msra.mxu0 0.0
  %342 = vmatprep.subr.mxu0 0.0
  %343 = vmatpush1.msra.mxu0 0.0
  %344 = vmatprep.subr.mxu0 0.0
  %345 = vmatpush1.msra.mxu0 0.0
  %346 = vmatprep.subr.mxu0 0.0
  %347 = vmatpush1.msra.mxu0 0.0
  %348 = vmatprep.subr.mxu0 0.0
  %349 = vmatpush1.msra.mxu0 0.0
  %350 = vmatprep.subr.mxu0 0.0
  %351 = vmatpush1.msra.mxu0 0.0
  %352 = vmatprep.subr.mxu0 0.0
  %353 = vmatpush1.msra.mxu0 0.0
  %354 = vmatprep.subr.mxu0 0.0
  %355 = vmatpush1.msra.mxu0 0.0
  %356 = vmatprep.subr.mxu0 0.0
  %v357 = vand.u32 %v21, 4294901760
  %v358 = vsub.f32 %v21, %v357
  %v359 = vand.u32 %v358, 4294901760
  %360 = vmatpush1.msra.mxu0 %v359
  %361 = vmatprep.subr.mxu0 0.0
  %362 = vmatpush2.msra.mxu0 0.0
  %363 = vmatprep.subr.mxu0 0.0
  %364 = vmatpush2.msra.mxu0 0.0
  %365 = vmatprep.subr.mxu0 0.0
  %366 = vmatpush2.msra.mxu0 0.0
  %367 = vmatprep.subr.mxu0 0.0
  %368 = vmatpush2.msra.mxu0 0.0
  %369 = vmatprep.subr.mxu0 0.0
  %370 = vmatpush2.msra.mxu0 0.0
  %371 = vmatprep.subr.mxu0 0.0
  %372 = vmatpush2.msra.mxu0 0.0
  %373 = vmatprep.subr.mxu0 0.0
  %374 = vmatpush2.msra.mxu0 0.0
  %375 = vmatprep.subr.mxu0 0.0
  %376 = vmatpush2.msra.mxu0 0.0
  %377 = vmatprep.subr.mxu0 0.0
  %378 = vmatpush2.msra.mxu0 0.0
  %379 = vmatprep.subr.mxu0 0.0
  %380 = vmatpush2.msra.mxu0 0.0
  %381 = vmatprep.subr.mxu0 0.0
  %382 = vmatpush2.msra.mxu0 0.0
  %383 = vmatprep.subr.mxu0 0.0
  %384 = vmatpush2.msra.mxu0 0.0
  %385 = vmatprep.subr.mxu0 0.0
  %386 = vmatpush2.msra.mxu0 0.0
  %387 = vmatprep.subr.mxu0 0.0
  %388 = vmatpush2.msra.mxu0 0.0
  %389 = vmatprep.subr.mxu0 0.0
  %390 = vmatpush2.msra.mxu0 0.0
  %391 = vmatprep.subr.mxu0 0.0
  %392 = vmatpush2.msra.mxu0 0.0
  %393 = vmatprep.mubr.f32.mxu0 0.0
  %v394 = vand.u32 %v24, 4294901760
  %395 = vmatmul.mubr.f32.gmra.mxu0 %v394
  %v396 = vpop.f32.mrf.mxu0
  %v397 = vadd.f32 %v323, %v396
  %v398 = vpop.f32.mrf.mxu0
  %399 = vdwg.mxu0
  %400 = vmatprep.subr.mxu0 0.0
  %401 = vmatpush1.msra.mxu0 0.0
  %402 = vmatprep.subr.mxu0 0.0
  %403 = vmatpush1.msra.mxu0 0.0
  %404 = vmatprep.subr.mxu0 0.0
  %405 = vmatpush1.msra.mxu0 0.0
  %406 = vmatprep.subr.mxu0 0.0
  %407 = vmatpush1.msra.mxu0 0.0
  %408 = vmatprep.subr.mxu0 0.0
  %409 = vmatpush1.msra.mxu0 0.0
  %410 = vmatprep.subr.mxu0 0.0
  %411 = vmatpush1.msra.mxu0 0.0
  %412 = vmatprep.subr.mxu0 0.0
  %413 = vmatpush1.msra.mxu0 0.0
  %414 = vmatprep.subr.mxu0 0.0
  %415 = vmatpush1.msra.mxu0 0.0
  %416 = vmatprep.subr.mxu0 0.0
  %417 = vmatpush1.msra.mxu0 0.0
  %418 = vmatprep.subr.mxu0 0.0
  %419 = vmatpush1.msra.mxu0 0.0
  %420 = vmatprep.subr.mxu0 0.0
  %421 = vmatpush1.msra.mxu0 0.0
  %422 = vmatprep.subr.mxu0 0.0
  %423 = vmatpush1.msra.mxu0 0.0
  %424 = vmatprep.subr.mxu0 0.0
  %425 = vmatpush1.msra.mxu0 0.0
  %426 = vmatprep.subr.mxu0 0.0
  %427 = vmatpush1.msra.mxu0 0.0
  %428 = vmatprep.subr.mxu0 0.0
  %429 = vmatpush1.msra.mxu0 0.0
  %430 = vmatprep.subr.mxu0 0.0
  %v431 = vand.u32 %v21, 4294901760
  %432 = vmatpush1.msra.mxu0 %v431
  %433 = vmatprep.subr.mxu0 0.0
  %434 = vmatpush2.msra.mxu0 0.0
  %435 = vmatprep.subr.mxu0 0.0
  %436 = vmatpush2.msra.mxu0 0.0
  %437 = vmatprep.subr.mxu0 0.0
  %438 = vmatpush2.msra.mxu0 0.0
  %439 = vmatprep.subr.mxu0 0.0
  %440 = vmatpush2.msra.mxu0 0.0
  %441 = vmatprep.subr.mxu0 0.0
  %442 = vmatpush2.msra.mxu0 0.0
  %443 = vmatprep.subr.mxu0 0.0
  %444 = vmatpush2.msra.mxu0 0.0
  %445 = vmatprep.subr.mxu0 0.0
  %446 = vmatpush2.msra.mxu0 0.0
  %447 = vmatprep.subr.mxu0 0.0
  %448 = vmatpush2.msra.mxu0 0.0
  %449 = vmatprep.subr.mxu0 0.0
  %450 = vmatpush2.msra.mxu0 0.0
  %451 = vmatprep.subr.mxu0 0.0
  %452 = vmatpush2.msra.mxu0 0.0
  %453 = vmatprep.subr.mxu0 0.0
  %454 = vmatpush2.msra.mxu0 0.0
  %455 = vmatprep.subr.mxu0 0.0
  %456 = vmatpush2.msra.mxu0 0.0
  %457 = vmatprep.subr.mxu0 0.0
  %458 = vmatpush2.msra.mxu0 0.0
  %459 = vmatprep.subr.mxu0 0.0
  %460 = vmatpush2.msra.mxu0 0.0
  %461 = vmatprep.subr.mxu0 0.0
  %462 = vmatpush2.msra.mxu0 0.0
  %463 = vmatprep.subr.mxu0 0.0
  %464 = vmatpush2.msra.mxu0 0.0
  %465 = vmatprep.mubr.f32.mxu0 0.0
  %v466 = vand.u32 %v24, 4294901760
  %467 = vmatmul.mubr.f32.gmra.mxu0 %v466
  %v468 = vpop.f32.mrf.mxu0
  %v469 = vadd.f32 %v397, %v468
  %v470 = vpop.f32.mrf.mxu0
  %471 = vdwg.mxu0
  %473 = vset.pattern.permute.xlu0 0
  %474 = vperm.xlu0 %473, %v469
  %v475 = vpop.permute.xlu0 %474
  %v477 = vsub.f32 %v14, %v475
  %v478 = vsub.f32 %v15, %v475
  %v479 = vmul.f32 %v477, %v477
  %v480 = vmul.f32 %v478, %v478
  %v481 = vadd.f32 %v479, %v480
  %482 = vadd.xlane.f32.xlu0 %v481
  %v483 = vpop.xlane.xlu0 %482
  %484 = vmatprep.subr.mxu0 0.0
  %485 = vmatpush1.msra.mxu0 0.0
  %486 = vmatprep.subr.mxu0 0.0
  %487 = vmatpush1.msra.mxu0 0.0
  %488 = vmatprep.subr.mxu0 0.0
  %489 = vmatpush1.msra.mxu0 0.0
  %490 = vmatprep.subr.mxu0 0.0
  %491 = vmatpush1.msra.mxu0 0.0
  %492 = vmatprep.subr.mxu0 0.0
  %493 = vmatpush1.msra.mxu0 0.0
  %494 = vmatprep.subr.mxu0 0.0
  %495 = vmatpush1.msra.mxu0 0.0
  %496 = vmatprep.subr.mxu0 0.0
  %497 = vmatpush1.msra.mxu0 0.0
  %498 = vmatprep.subr.mxu0 0.0
  %499 = vmatpush1.msra.mxu0 0.0
  %500 = vmatprep.subr.mxu0 0.0
  %501 = vmatpush1.msra.mxu0 0.0
  %502 = vmatprep.subr.mxu0 0.0
  %503 = vmatpush1.msra.mxu0 0.0
  %504 = vmatprep.subr.mxu0 0.0
  %505 = vmatpush1.msra.mxu0 0.0
  %506 = vmatprep.subr.mxu0 0.0
  %507 = vmatpush1.msra.mxu0 0.0
  %508 = vmatprep.subr.mxu0 0.0
  %509 = vmatpush1.msra.mxu0 0.0
  %510 = vmatprep.subr.mxu0 0.0
  %511 = vmatpush1.msra.mxu0 0.0
  %512 = vmatprep.subr.mxu0 0.0
  %513 = vmatpush1.msra.mxu0 0.0
  %514 = vmatprep.subr.mxu0 0.0
  %v515 = vand.u32 %v483, 4294901760
  %516 = vmatpush1.msra.mxu0 %v515
  %517 = vmatprep.subr.mxu0 0.0
  %518 = vmatpush2.msra.mxu0 0.0
  %519 = vmatprep.subr.mxu0 0.0
  %520 = vmatpush2.msra.mxu0 0.0
  %521 = vmatprep.subr.mxu0 0.0
  %522 = vmatpush2.msra.mxu0 0.0
  %523 = vmatprep.subr.mxu0 0.0
  %524 = vmatpush2.msra.mxu0 0.0
  %525 = vmatprep.subr.mxu0 0.0
  %526 = vmatpush2.msra.mxu0 0.0
  %527 = vmatprep.subr.mxu0 0.0
  %528 = vmatpush2.msra.mxu0 0.0
  %529 = vmatprep.subr.mxu0 0.0
  %530 = vmatpush2.msra.mxu0 0.0
  %531 = vmatprep.subr.mxu0 0.0
  %532 = vmatpush2.msra.mxu0 0.0
  %533 = vmatprep.subr.mxu0 0.0
  %534 = vmatpush2.msra.mxu0 0.0
  %535 = vmatprep.subr.mxu0 0.0
  %536 = vmatpush2.msra.mxu0 0.0
  %537 = vmatprep.subr.mxu0 0.0
  %538 = vmatpush2.msra.mxu0 0.0
  %539 = vmatprep.subr.mxu0 0.0
  %540 = vmatpush2.msra.mxu0 0.0
  %541 = vmatprep.subr.mxu0 0.0
  %542 = vmatpush2.msra.mxu0 0.0
  %543 = vmatprep.subr.mxu0 0.0
  %544 = vmatpush2.msra.mxu0 0.0
  %545 = vmatprep.subr.mxu0 0.0
  %546 = vmatpush2.msra.mxu0 0.0
  %547 = vmatprep.subr.mxu0 0.0
  %548 = vmatpush2.msra.mxu0 0.0
  %549 = vmatprep.mubr.f32.mxu0 0.0
  %v550 = vand.u32 %v24, 4294901760
  %v551 = vsub.f32 %v24, %v550
  %v552 = vand.u32 %v551, 4294901760
  %v553 = vsub.f32 %v551, %v552
  %v554 = vand.u32 %v553, 4294901760
  %555 = vmatmul.mubr.f32.gmra.mxu0 %v554
  %v556 = vpop.f32.mrf.mxu0
  %v557 = vadd.f32 1e-05, %v556
  %v558 = vpop.f32.mrf.mxu0
  %559 = vdwg.mxu0
  %560 = vmatprep.subr.mxu0 0.0
  %561 = vmatpush1.msra.mxu0 0.0
  %562 = vmatprep.subr.mxu0 0.0
  %563 = vmatpush1.msra.mxu0 0.0
  %564 = vmatprep.subr.mxu0 0.0
  %565 = vmatpush1.msra.mxu0 0.0
  %566 = vmatprep.subr.mxu0 0.0
  %567 = vmatpush1.msra.mxu0 0.0
  %568 = vmatprep.subr.mxu0 0.0
  %569 = vmatpush1.msra.mxu0 0.0
  %570 = vmatprep.subr.mxu0 0.0
  %571 = vmatpush1.msra.mxu0 0.0
  %572 = vmatprep.subr.mxu0 0.0
  %573 = vmatpush1.msra.mxu0 0.0
  %574 = vmatprep.subr.mxu0 0.0
  %575 = vmatpush1.msra.mxu0 0.0
  %576 = vmatprep.subr.mxu0 0.0
  %577 = vmatpush1.msra.mxu0 0.0
  %578 = vmatprep.subr.mxu0 0.0
  %579 = vmatpush1.msra.mxu0 0.0
  %580 = vmatprep.subr.mxu0 0.0
  %581 = vmatpush1.msra.mxu0 0.0
  %582 = vmatprep.subr.mxu0 0.0
  %583 = vmatpush1.msra.mxu0 0.0
  %584 = vmatprep.subr.mxu0 0.0
  %585 = vmatpush1.msra.mxu0 0.0
  %586 = vmatprep.subr.mxu0 0.0
  %587 = vmatpush1.msra.mxu0 0.0
  %588 = vmatprep.subr.mxu0 0.0
  %589 = vmatpush1.msra.mxu0 0.0
  %590 = vmatprep.subr.mxu0 0.0
  %v591 = vand.u32 %v483, 4294901760
  %v592 = vsub.f32 %v483, %v591
  %v593 = vand.u32 %v592, 4294901760
  %v594 = vsub.f32 %v592, %v593
  %v595 = vand.u32 %v594, 4294901760
  %596 = vmatpush1.msra.mxu0 %v595
  %597 = vmatprep.subr.mxu0 0.0
  %598 = vmatpush2.msra.mxu0 0.0
  %599 = vmatprep.subr.mxu0 0.0
  %600 = vmatpush2.msra.mxu0 0.0
  %601 = vmatprep.subr.mxu0 0.0
  %602 = vmatpush2.msra.mxu0 0.0
  %603 = vmatprep.subr.mxu0 0.0
  %604 = vmatpush2.msra.mxu0 0.0
  %605 = vmatprep.subr.mxu0 0.0
  %606 = vmatpush2.msra.mxu0 0.0
  %607 = vmatprep.subr.mxu0 0.0
  %608 = vmatpush2.msra.mxu0 0.0
  %609 = vmatprep.subr.mxu0 0.0
  %610 = vmatpush2.msra.mxu0 0.0
  %611 = vmatprep.subr.mxu0 0.0
  %612 = vmatpush2.msra.mxu0 0.0
  %613 = vmatprep.subr.mxu0 0.0
  %614 = vmatpush2.msra.mxu0 0.0
  %615 = vmatprep.subr.mxu0 0.0
  %616 = vmatpush2.msra.mxu0 0.0
  %617 = vmatprep.subr.mxu0 0.0
  %618 = vmatpush2.msra.mxu0 0.0
  %619 = vmatprep.subr.mxu0 0.0
  %620 = vmatpush2.msra.mxu0 0.0
  %621 = vmatprep.subr.mxu0 0.0
  %622 = vmatpush2.msra.mxu0 0.0
  %623 = vmatprep.subr.mxu0 0.0
  %624 = vmatpush2.msra.mxu0 0.0
  %625 = vmatprep.subr.mxu0 0.0
  %626 = vmatpush2.msra.mxu0 0.0
  %627 = vmatprep.subr.mxu0 0.0
  %628 = vmatpush2.msra.mxu0 0.0
  %629 = vmatprep.mubr.f32.mxu0 0.0
  %v630 = vand.u32 %v24, 4294901760
  %631 = vmatmul.mubr.f32.gmra.mxu0 %v630
  %v632 = vpop.f32.mrf.mxu0
  %v633 = vadd.f32 %v557, %v632
  %v634 = vpop.f32.mrf.mxu0
  %635 = vdwg.mxu0
  %636 = vmatprep.subr.mxu0 0.0
  %637 = vmatpush1.msra.mxu0 0.0
  %638 = vmatprep.subr.mxu0 0.0
  %639 = vmatpush1.msra.mxu0 0.0
  %640 = vmatprep.subr.mxu0 0.0
  %641 = vmatpush1.msra.mxu0 0.0
  %642 = vmatprep.subr.mxu0 0.0
  %643 = vmatpush1.msra.mxu0 0.0
  %644 = vmatprep.subr.mxu0 0.0
  %645 = vmatpush1.msra.mxu0 0.0
  %646 = vmatprep.subr.mxu0 0.0
  %647 = vmatpush1.msra.mxu0 0.0
  %648 = vmatprep.subr.mxu0 0.0
  %649 = vmatpush1.msra.mxu0 0.0
  %650 = vmatprep.subr.mxu0 0.0
  %651 = vmatpush1.msra.mxu0 0.0
  %652 = vmatprep.subr.mxu0 0.0
  %653 = vmatpush1.msra.mxu0 0.0
  %654 = vmatprep.subr.mxu0 0.0
  %655 = vmatpush1.msra.mxu0 0.0
  %656 = vmatprep.subr.mxu0 0.0
  %657 = vmatpush1.msra.mxu0 0.0
  %658 = vmatprep.subr.mxu0 0.0
  %659 = vmatpush1.msra.mxu0 0.0
  %660 = vmatprep.subr.mxu0 0.0
  %661 = vmatpush1.msra.mxu0 0.0
  %662 = vmatprep.subr.mxu0 0.0
  %663 = vmatpush1.msra.mxu0 0.0
  %664 = vmatprep.subr.mxu0 0.0
  %665 = vmatpush1.msra.mxu0 0.0
  %666 = vmatprep.subr.mxu0 0.0
  %v667 = vand.u32 %v483, 4294901760
  %v668 = vsub.f32 %v483, %v667
  %669 = vmatpush1.msra.mxu0 %v668
  %670 = vmatprep.subr.mxu0 0.0
  %671 = vmatpush2.msra.mxu0 0.0
  %672 = vmatprep.subr.mxu0 0.0
  %673 = vmatpush2.msra.mxu0 0.0
  %674 = vmatprep.subr.mxu0 0.0
  %675 = vmatpush2.msra.mxu0 0.0
  %676 = vmatprep.subr.mxu0 0.0
  %677 = vmatpush2.msra.mxu0 0.0
  %678 = vmatprep.subr.mxu0 0.0
  %679 = vmatpush2.msra.mxu0 0.0
  %680 = vmatprep.subr.mxu0 0.0
  %681 = vmatpush2.msra.mxu0 0.0
  %682 = vmatprep.subr.mxu0 0.0
  %683 = vmatpush2.msra.mxu0 0.0
  %684 = vmatprep.subr.mxu0 0.0
  %685 = vmatpush2.msra.mxu0 0.0
  %686 = vmatprep.subr.mxu0 0.0
  %687 = vmatpush2.msra.mxu0 0.0
  %688 = vmatprep.subr.mxu0 0.0
  %689 = vmatpush2.msra.mxu0 0.0
  %690 = vmatprep.subr.mxu0 0.0
  %691 = vmatpush2.msra.mxu0 0.0
  %692 = vmatprep.subr.mxu0 0.0
  %693 = vmatpush2.msra.mxu0 0.0
  %694 = vmatprep.subr.mxu0 0.0
  %695 = vmatpush2.msra.mxu0 0.0
  %696 = vmatprep.subr.mxu0 0.0
  %697 = vmatpush2.msra.mxu0 0.0
  %698 = vmatprep.subr.mxu0 0.0
  %699 = vmatpush2.msra.mxu0 0.0
  %700 = vmatprep.subr.mxu0 0.0
  %701 = vmatpush2.msra.mxu0 0.0
  %702 = vmatprep.mubr.f32.mxu0 0.0
  %v703 = vand.u32 %v24, 4294901760
  %v704 = vsub.f32 %v24, %v703
  %705 = vmatmul.mubr.f32.gmra.mxu0 %v704
  %v706 = vpop.f32.mrf.mxu0
  %v707 = vadd.f32 %v633, %v706
  %v708 = vpop.f32.mrf.mxu0
  %709 = vdwg.mxu0
  %710 = vmatprep.subr.mxu0 0.0
  %711 = vmatpush1.msra.mxu0 0.0
  %712 = vmatprep.subr.mxu0 0.0
  %713 = vmatpush1.msra.mxu0 0.0
  %714 = vmatprep.subr.mxu0 0.0
  %715 = vmatpush1.msra.mxu0 0.0
  %716 = vmatprep.subr.mxu0 0.0
  %717 = vmatpush1.msra.mxu0 0.0
  %718 = vmatprep.subr.mxu0 0.0
  %719 = vmatpush1.msra.mxu0 0.0
  %720 = vmatprep.subr.mxu0 0.0
  %721 = vmatpush1.msra.mxu0 0.0
  %722 = vmatprep.subr.mxu0 0.0
  %723 = vmatpush1.msra.mxu0 0.0
  %724 = vmatprep.subr.mxu0 0.0
  %725 = vmatpush1.msra.mxu0 0.0
  %726 = vmatprep.subr.mxu0 0.0
  %727 = vmatpush1.msra.mxu0 0.0
  %728 = vmatprep.subr.mxu0 0.0
  %729 = vmatpush1.msra.mxu0 0.0
  %730 = vmatprep.subr.mxu0 0.0
  %731 = vmatpush1.msra.mxu0 0.0
  %732 = vmatprep.subr.mxu0 0.0
  %733 = vmatpush1.msra.mxu0 0.0
  %734 = vmatprep.subr.mxu0 0.0
  %735 = vmatpush1.msra.mxu0 0.0
  %736 = vmatprep.subr.mxu0 0.0
  %737 = vmatpush1.msra.mxu0 0.0
  %738 = vmatprep.subr.mxu0 0.0
  %739 = vmatpush1.msra.mxu0 0.0
  %740 = vmatprep.subr.mxu0 0.0
  %v741 = vand.u32 %v483, 4294901760
  %742 = vmatpush1.msra.mxu0 %v741
  %743 = vmatprep.subr.mxu0 0.0
  %744 = vmatpush2.msra.mxu0 0.0
  %745 = vmatprep.subr.mxu0 0.0
  %746 = vmatpush2.msra.mxu0 0.0
  %747 = vmatprep.subr.mxu0 0.0
  %748 = vmatpush2.msra.mxu0 0.0
  %749 = vmatprep.subr.mxu0 0.0
  %750 = vmatpush2.msra.mxu0 0.0
  %751 = vmatprep.subr.mxu0 0.0
  %752 = vmatpush2.msra.mxu0 0.0
  %753 = vmatprep.subr.mxu0 0.0
  %754 = vmatpush2.msra.mxu0 0.0
  %755 = vmatprep.subr.mxu0 0.0
  %756 = vmatpush2.msra.mxu0 0.0
  %757 = vmatprep.subr.mxu0 0.0
  %758 = vmatpush2.msra.mxu0 0.0
  %759 = vmatprep.subr.mxu0 0.0
  %760 = vmatpush2.msra.mxu0 0.0
  %761 = vmatprep.subr.mxu0 0.0
  %762 = vmatpush2.msra.mxu0 0.0
  %763 = vmatprep.subr.mxu0 0.0
  %764 = vmatpush2.msra.mxu0 0.0
  %765 = vmatprep.subr.mxu0 0.0
  %766 = vmatpush2.msra.mxu0 0.0
  %767 = vmatprep.subr.mxu0 0.0
  %768 = vmatpush2.msra.mxu0 0.0
  %769 = vmatprep.subr.mxu0 0.0
  %770 = vmatpush2.msra.mxu0 0.0
  %771 = vmatprep.subr.mxu0 0.0
  %772 = vmatpush2.msra.mxu0 0.0
  %773 = vmatprep.subr.mxu0 0.0
  %774 = vmatpush2.msra.mxu0 0.0
  %775 = vmatprep.mubr.f32.mxu0 0.0
  %v776 = vand.u32 %v24, 4294901760
  %v777 = vsub.f32 %v24, %v776
  %v778 = vand.u32 %v777, 4294901760
  %779 = vmatmul.mubr.f32.gmra.mxu0 %v778
  %v780 = vpop.f32.mrf.mxu0
  %v781 = vadd.f32 %v707, %v780
  %v782 = vpop.f32.mrf.mxu0
  %783 = vdwg.mxu0
  %784 = vmatprep.subr.mxu0 0.0
  %785 = vmatpush1.msra.mxu0 0.0
  %786 = vmatprep.subr.mxu0 0.0
  %787 = vmatpush1.msra.mxu0 0.0
  %788 = vmatprep.subr.mxu0 0.0
  %789 = vmatpush1.msra.mxu0 0.0
  %790 = vmatprep.subr.mxu0 0.0
  %791 = vmatpush1.msra.mxu0 0.0
  %792 = vmatprep.subr.mxu0 0.0
  %793 = vmatpush1.msra.mxu0 0.0
  %794 = vmatprep.subr.mxu0 0.0
  %795 = vmatpush1.msra.mxu0 0.0
  %796 = vmatprep.subr.mxu0 0.0
  %797 = vmatpush1.msra.mxu0 0.0
  %798 = vmatprep.subr.mxu0 0.0
  %799 = vmatpush1.msra.mxu0 0.0
  %800 = vmatprep.subr.mxu0 0.0
  %801 = vmatpush1.msra.mxu0 0.0
  %802 = vmatprep.subr.mxu0 0.0
  %803 = vmatpush1.msra.mxu0 0.0
  %804 = vmatprep.subr.mxu0 0.0
  %805 = vmatpush1.msra.mxu0 0.0
  %806 = vmatprep.subr.mxu0 0.0
  %807 = vmatpush1.msra.mxu0 0.0
  %808 = vmatprep.subr.mxu0 0.0
  %809 = vmatpush1.msra.mxu0 0.0
  %810 = vmatprep.subr.mxu0 0.0
  %811 = vmatpush1.msra.mxu0 0.0
  %812 = vmatprep.subr.mxu0 0.0
  %813 = vmatpush1.msra.mxu0 0.0
  %814 = vmatprep.subr.mxu0 0.0
  %v815 = vand.u32 %v483, 4294901760
  %v816 = vsub.f32 %v483, %v815
  %v817 = vand.u32 %v816, 4294901760
  %818 = vmatpush1.msra.mxu0 %v817
  %819 = vmatprep.subr.mxu0 0.0
  %820 = vmatpush2.msra.mxu0 0.0
  %821 = vmatprep.subr.mxu0 0.0
  %822 = vmatpush2.msra.mxu0 0.0
  %823 = vmatprep.subr.mxu0 0.0
  %824 = vmatpush2.msra.mxu0 0.0
  %825 = vmatprep.subr.mxu0 0.0
  %826 = vmatpush2.msra.mxu0 0.0
  %827 = vmatprep.subr.mxu0 0.0
  %828 = vmatpush2.msra.mxu0 0.0
  %829 = vmatprep.subr.mxu0 0.0
  %830 = vmatpush2.msra.mxu0 0.0
  %831 = vmatprep.subr.mxu0 0.0
  %832 = vmatpush2.msra.mxu0 0.0
  %833 = vmatprep.subr.mxu0 0.0
  %834 = vmatpush2.msra.mxu0 0.0
  %835 = vmatprep.subr.mxu0 0.0
  %836 = vmatpush2.msra.mxu0 0.0
  %837 = vmatprep.subr.mxu0 0.0
  %838 = vmatpush2.msra.mxu0 0.0
  %839 = vmatprep.subr.mxu0 0.0
  %840 = vmatpush2.msra.mxu0 0.0
  %841 = vmatprep.subr.mxu0 0.0
  %842 = vmatpush2.msra.mxu0 0.0
  %843 = vmatprep.subr.mxu0 0.0
  %844 = vmatpush2.msra.mxu0 0.0
  %845 = vmatprep.subr.mxu0 0.0
  %846 = vmatpush2.msra.mxu0 0.0
  %847 = vmatprep.subr.mxu0 0.0
  %848 = vmatpush2.msra.mxu0 0.0
  %849 = vmatprep.subr.mxu0 0.0
  %850 = vmatpush2.msra.mxu0 0.0
  %851 = vmatprep.mubr.f32.mxu0 0.0
  %v852 = vand.u32 %v24, 4294901760
  %853 = vmatmul.mubr.f32.gmra.mxu0 %v852
  %v854 = vpop.f32.mrf.mxu0
  %v855 = vadd.f32 %v781, %v854
  %v856 = vpop.f32.mrf.mxu0
  %857 = vdwg.mxu0
  %858 = vmatprep.subr.mxu0 0.0
  %859 = vmatpush1.msra.mxu0 0.0
  %860 = vmatprep.subr.mxu0 0.0
  %861 = vmatpush1.msra.mxu0 0.0
  %862 = vmatprep.subr.mxu0 0.0
  %863 = vmatpush1.msra.mxu0 0.0
  %864 = vmatprep.subr.mxu0 0.0
  %865 = vmatpush1.msra.mxu0 0.0
  %866 = vmatprep.subr.mxu0 0.0
  %867 = vmatpush1.msra.mxu0 0.0
  %868 = vmatprep.subr.mxu0 0.0
  %869 = vmatpush1.msra.mxu0 0.0
  %870 = vmatprep.subr.mxu0 0.0
  %871 = vmatpush1.msra.mxu0 0.0
  %872 = vmatprep.subr.mxu0 0.0
  %873 = vmatpush1.msra.mxu0 0.0
  %874 = vmatprep.subr.mxu0 0.0
  %875 = vmatpush1.msra.mxu0 0.0
  %876 = vmatprep.subr.mxu0 0.0
  %877 = vmatpush1.msra.mxu0 0.0
  %878 = vmatprep.subr.mxu0 0.0
  %879 = vmatpush1.msra.mxu0 0.0
  %880 = vmatprep.subr.mxu0 0.0
  %881 = vmatpush1.msra.mxu0 0.0
  %882 = vmatprep.subr.mxu0 0.0
  %883 = vmatpush1.msra.mxu0 0.0
  %884 = vmatprep.subr.mxu0 0.0
  %885 = vmatpush1.msra.mxu0 0.0
  %886 = vmatprep.subr.mxu0 0.0
  %887 = vmatpush1.msra.mxu0 0.0
  %888 = vmatprep.subr.mxu0 0.0
  %v889 = vand.u32 %v483, 4294901760
  %890 = vmatpush1.msra.mxu0 %v889
  %891 = vmatprep.subr.mxu0 0.0
  %892 = vmatpush2.msra.mxu0 0.0
  %893 = vmatprep.subr.mxu0 0.0
  %894 = vmatpush2.msra.mxu0 0.0
  %895 = vmatprep.subr.mxu0 0.0
  %896 = vmatpush2.msra.mxu0 0.0
  %897 = vmatprep.subr.mxu0 0.0
  %898 = vmatpush2.msra.mxu0 0.0
  %899 = vmatprep.subr.mxu0 0.0
  %900 = vmatpush2.msra.mxu0 0.0
  %901 = vmatprep.subr.mxu0 0.0
  %902 = vmatpush2.msra.mxu0 0.0
  %903 = vmatprep.subr.mxu0 0.0
  %904 = vmatpush2.msra.mxu0 0.0
  %905 = vmatprep.subr.mxu0 0.0
  %906 = vmatpush2.msra.mxu0 0.0
  %907 = vmatprep.subr.mxu0 0.0
  %908 = vmatpush2.msra.mxu0 0.0
  %909 = vmatprep.subr.mxu0 0.0
  %910 = vmatpush2.msra.mxu0 0.0
  %911 = vmatprep.subr.mxu0 0.0
  %912 = vmatpush2.msra.mxu0 0.0
  %913 = vmatprep.subr.mxu0 0.0
  %914 = vmatpush2.msra.mxu0 0.0
  %915 = vmatprep.subr.mxu0 0.0
  %916 = vmatpush2.msra.mxu0 0.0
  %917 = vmatprep.subr.mxu0 0.0
  %918 = vmatpush2.msra.mxu0 0.0
  %919 = vmatprep.subr.mxu0 0.0
  %920 = vmatpush2.msra.mxu0 0.0
  %921 = vmatprep.subr.mxu0 0.0
  %922 = vmatpush2.msra.mxu0 0.0
  %923 = vmatprep.mubr.f32.mxu0 0.0
  %v924 = vand.u32 %v24, 4294901760
  %925 = vmatmul.mubr.f32.gmra.mxu0 %v924
  %v926 = vpop.f32.mrf.mxu0
  %v927 = vadd.f32 %v855, %v926
  %v928 = vpop.f32.mrf.mxu0
  %929 = vdwg.mxu0
  %v930 = vrsqrt.pop %v927
  %932 = vset.pattern.permute.xlu0 0
  %933 = vperm.xlu0 %932, %v930
  %v934 = vpop.permute.xlu0 %933
  %v936 = vmul.f32 %v477, %v934
  %v937 = vmul.f32 %v478, %v934
  %v939 = vsel %vm22, %v18, 0
  %941 = vmatprep.subr.mxu0 0.0
  %942 = vmatpush1.msra.mxu0 0.0
  %943 = vmatprep.subr.mxu0 0.0
  %944 = vmatpush1.msra.mxu0 0.0
  %945 = vmatprep.subr.mxu0 0.0
  %946 = vmatpush1.msra.mxu0 0.0
  %947 = vmatprep.subr.mxu0 0.0
  %948 = vmatpush1.msra.mxu0 0.0
  %949 = vmatprep.subr.mxu0 0.0
  %950 = vmatpush1.msra.mxu0 0.0
  %951 = vmatprep.subr.mxu0 0.0
  %952 = vmatpush1.msra.mxu0 0.0
  %953 = vmatprep.subr.mxu0 0.0
  %954 = vmatpush1.msra.mxu0 0.0
  %955 = vmatprep.subr.mxu0 0.0
  %956 = vmatpush1.msra.mxu0 0.0
  %957 = vmatprep.subr.mxu0 0.0
  %958 = vmatpush1.msra.mxu0 0.0
  %959 = vmatprep.subr.mxu0 0.0
  %960 = vmatpush1.msra.mxu0 0.0
  %961 = vmatprep.subr.mxu0 0.0
  %962 = vmatpush1.msra.mxu0 0.0
  %963 = vmatprep.subr.mxu0 0.0
  %964 = vmatpush1.msra.mxu0 0.0
  %965 = vmatprep.subr.mxu0 0.0
  %966 = vmatpush1.msra.mxu0 0.0
  %967 = vmatprep.subr.mxu0 0.0
  %968 = vmatpush1.msra.mxu0 0.0
  %969 = vmatprep.subr.mxu0 0.0
  %970 = vmatpush1.msra.mxu0 0.0
  %v971 = vand.u32 %v937, 4294901760
  %972 = vmatprep.subr.mxu0 %v971
  %v973 = vand.u32 %v936, 4294901760
  %974 = vmatpush1.msra.mxu0 %v973
  %975 = vmatprep.subr.mxu0 0.0
  %976 = vmatpush2.msra.mxu0 0.0
  %977 = vmatprep.subr.mxu0 0.0
  %978 = vmatpush2.msra.mxu0 0.0
  %979 = vmatprep.subr.mxu0 0.0
  %980 = vmatpush2.msra.mxu0 0.0
  %981 = vmatprep.subr.mxu0 0.0
  %982 = vmatpush2.msra.mxu0 0.0
  %983 = vmatprep.subr.mxu0 0.0
  %984 = vmatpush2.msra.mxu0 0.0
  %985 = vmatprep.subr.mxu0 0.0
  %986 = vmatpush2.msra.mxu0 0.0
  %987 = vmatprep.subr.mxu0 0.0
  %988 = vmatpush2.msra.mxu0 0.0
  %989 = vmatprep.subr.mxu0 0.0
  %990 = vmatpush2.msra.mxu0 0.0
  %991 = vmatprep.subr.mxu0 0.0
  %992 = vmatpush2.msra.mxu0 0.0
  %993 = vmatprep.subr.mxu0 0.0
  %994 = vmatpush2.msra.mxu0 0.0
  %995 = vmatprep.subr.mxu0 0.0
  %996 = vmatpush2.msra.mxu0 0.0
  %997 = vmatprep.subr.mxu0 0.0
  %998 = vmatpush2.msra.mxu0 0.0
  %999 = vmatprep.subr.mxu0 0.0
  %1000 = vmatpush2.msra.mxu0 0.0
  %1001 = vmatprep.subr.mxu0 0.0
  %1002 = vmatpush2.msra.mxu0 0.0
  %1003 = vmatprep.subr.mxu0 0.0
  %1004 = vmatpush2.msra.mxu0 0.0
  %1005 = vmatprep.subr.mxu0 0.0
  %1006 = vmatpush2.msra.mxu0 0.0
  %1007 = vmatprep.mubr.f32.mxu0 0.0
  %v1008 = vand.u32 %v939, 4294901760
  %v1009 = vsub.f32 %v939, %v1008
  %v1010 = vand.u32 %v1009, 4294901760
  %v1011 = vsub.f32 %v1009, %v1010
  %v1012 = vand.u32 %v1011, 4294901760
  %1013 = vmatmul.mubr.f32.gmra.mxu0 %v1012
  %v1014 = vpop.f32.mrf.mxu0
  %v1015 = vadd.f32 0.0, %v1014
  %v1016 = vpop.f32.mrf.mxu0
  %v1017 = vadd.f32 0.0, %v1016
  %1018 = vdwg.mxu0
  %1019 = vmatprep.subr.mxu0 0.0
  %1020 = vmatpush1.msra.mxu0 0.0
  %1021 = vmatprep.subr.mxu0 0.0
  %1022 = vmatpush1.msra.mxu0 0.0
  %1023 = vmatprep.subr.mxu0 0.0
  %1024 = vmatpush1.msra.mxu0 0.0
  %1025 = vmatprep.subr.mxu0 0.0
  %1026 = vmatpush1.msra.mxu0 0.0
  %1027 = vmatprep.subr.mxu0 0.0
  %1028 = vmatpush1.msra.mxu0 0.0
  %1029 = vmatprep.subr.mxu0 0.0
  %1030 = vmatpush1.msra.mxu0 0.0
  %1031 = vmatprep.subr.mxu0 0.0
  %1032 = vmatpush1.msra.mxu0 0.0
  %1033 = vmatprep.subr.mxu0 0.0
  %1034 = vmatpush1.msra.mxu0 0.0
  %1035 = vmatprep.subr.mxu0 0.0
  %1036 = vmatpush1.msra.mxu0 0.0
  %1037 = vmatprep.subr.mxu0 0.0
  %1038 = vmatpush1.msra.mxu0 0.0
  %1039 = vmatprep.subr.mxu0 0.0
  %1040 = vmatpush1.msra.mxu0 0.0
  %1041 = vmatprep.subr.mxu0 0.0
  %1042 = vmatpush1.msra.mxu0 0.0
  %1043 = vmatprep.subr.mxu0 0.0
  %1044 = vmatpush1.msra.mxu0 0.0
  %1045 = vmatprep.subr.mxu0 0.0
  %1046 = vmatpush1.msra.mxu0 0.0
  %1047 = vmatprep.subr.mxu0 0.0
  %1048 = vmatpush1.msra.mxu0 0.0
  %v1049 = vand.u32 %v937, 4294901760
  %v1050 = vsub.f32 %v937, %v1049
  %v1051 = vand.u32 %v1050, 4294901760
  %v1052 = vsub.f32 %v1050, %v1051
  %v1053 = vand.u32 %v1052, 4294901760
  %1054 = vmatprep.subr.mxu0 %v1053
  %v1055 = vand.u32 %v936, 4294901760
  %v1056 = vsub.f32 %v936, %v1055
  %v1057 = vand.u32 %v1056, 4294901760
  %v1058 = vsub.f32 %v1056, %v1057
  %v1059 = vand.u32 %v1058, 4294901760
  %1060 = vmatpush1.msra.mxu0 %v1059
  %1061 = vmatprep.subr.mxu0 0.0
  %1062 = vmatpush2.msra.mxu0 0.0
  %1063 = vmatprep.subr.mxu0 0.0
  %1064 = vmatpush2.msra.mxu0 0.0
  %1065 = vmatprep.subr.mxu0 0.0
  %1066 = vmatpush2.msra.mxu0 0.0
  %1067 = vmatprep.subr.mxu0 0.0
  %1068 = vmatpush2.msra.mxu0 0.0
  %1069 = vmatprep.subr.mxu0 0.0
  %1070 = vmatpush2.msra.mxu0 0.0
  %1071 = vmatprep.subr.mxu0 0.0
  %1072 = vmatpush2.msra.mxu0 0.0
  %1073 = vmatprep.subr.mxu0 0.0
  %1074 = vmatpush2.msra.mxu0 0.0
  %1075 = vmatprep.subr.mxu0 0.0
  %1076 = vmatpush2.msra.mxu0 0.0
  %1077 = vmatprep.subr.mxu0 0.0
  %1078 = vmatpush2.msra.mxu0 0.0
  %1079 = vmatprep.subr.mxu0 0.0
  %1080 = vmatpush2.msra.mxu0 0.0
  %1081 = vmatprep.subr.mxu0 0.0
  %1082 = vmatpush2.msra.mxu0 0.0
  %1083 = vmatprep.subr.mxu0 0.0
  %1084 = vmatpush2.msra.mxu0 0.0
  %1085 = vmatprep.subr.mxu0 0.0
  %1086 = vmatpush2.msra.mxu0 0.0
  %1087 = vmatprep.subr.mxu0 0.0
  %1088 = vmatpush2.msra.mxu0 0.0
  %1089 = vmatprep.subr.mxu0 0.0
  %1090 = vmatpush2.msra.mxu0 0.0
  %1091 = vmatprep.subr.mxu0 0.0
  %1092 = vmatpush2.msra.mxu0 0.0
  %1093 = vmatprep.mubr.f32.mxu0 0.0
  %v1094 = vand.u32 %v939, 4294901760
  %1095 = vmatmul.mubr.f32.gmra.mxu0 %v1094
  %v1096 = vpop.f32.mrf.mxu0
  %v1097 = vadd.f32 %v1015, %v1096
  %v1098 = vpop.f32.mrf.mxu0
  %v1099 = vadd.f32 %v1017, %v1098
  %1100 = vdwg.mxu0
  %1101 = vmatprep.subr.mxu0 0.0
  %1102 = vmatpush1.msra.mxu0 0.0
  %1103 = vmatprep.subr.mxu0 0.0
  %1104 = vmatpush1.msra.mxu0 0.0
  %1105 = vmatprep.subr.mxu0 0.0
  %1106 = vmatpush1.msra.mxu0 0.0
  %1107 = vmatprep.subr.mxu0 0.0
  %1108 = vmatpush1.msra.mxu0 0.0
  %1109 = vmatprep.subr.mxu0 0.0
  %1110 = vmatpush1.msra.mxu0 0.0
  %1111 = vmatprep.subr.mxu0 0.0
  %1112 = vmatpush1.msra.mxu0 0.0
  %1113 = vmatprep.subr.mxu0 0.0
  %1114 = vmatpush1.msra.mxu0 0.0
  %1115 = vmatprep.subr.mxu0 0.0
  %1116 = vmatpush1.msra.mxu0 0.0
  %1117 = vmatprep.subr.mxu0 0.0
  %1118 = vmatpush1.msra.mxu0 0.0
  %1119 = vmatprep.subr.mxu0 0.0
  %1120 = vmatpush1.msra.mxu0 0.0
  %1121 = vmatprep.subr.mxu0 0.0
  %1122 = vmatpush1.msra.mxu0 0.0
  %1123 = vmatprep.subr.mxu0 0.0
  %1124 = vmatpush1.msra.mxu0 0.0
  %1125 = vmatprep.subr.mxu0 0.0
  %1126 = vmatpush1.msra.mxu0 0.0
  %1127 = vmatprep.subr.mxu0 0.0
  %1128 = vmatpush1.msra.mxu0 0.0
  %1129 = vmatprep.subr.mxu0 0.0
  %1130 = vmatpush1.msra.mxu0 0.0
  %v1131 = vand.u32 %v937, 4294901760
  %v1132 = vsub.f32 %v937, %v1131
  %1133 = vmatprep.subr.mxu0 %v1132
  %v1134 = vand.u32 %v936, 4294901760
  %v1135 = vsub.f32 %v936, %v1134
  %1136 = vmatpush1.msra.mxu0 %v1135
  %1137 = vmatprep.subr.mxu0 0.0
  %1138 = vmatpush2.msra.mxu0 0.0
  %1139 = vmatprep.subr.mxu0 0.0
  %1140 = vmatpush2.msra.mxu0 0.0
  %1141 = vmatprep.subr.mxu0 0.0
  %1142 = vmatpush2.msra.mxu0 0.0
  %1143 = vmatprep.subr.mxu0 0.0
  %1144 = vmatpush2.msra.mxu0 0.0
  %1145 = vmatprep.subr.mxu0 0.0
  %1146 = vmatpush2.msra.mxu0 0.0
  %1147 = vmatprep.subr.mxu0 0.0
  %1148 = vmatpush2.msra.mxu0 0.0
  %1149 = vmatprep.subr.mxu0 0.0
  %1150 = vmatpush2.msra.mxu0 0.0
  %1151 = vmatprep.subr.mxu0 0.0
  %1152 = vmatpush2.msra.mxu0 0.0
  %1153 = vmatprep.subr.mxu0 0.0
  %1154 = vmatpush2.msra.mxu0 0.0
  %1155 = vmatprep.subr.mxu0 0.0
  %1156 = vmatpush2.msra.mxu0 0.0
  %1157 = vmatprep.subr.mxu0 0.0
  %1158 = vmatpush2.msra.mxu0 0.0
  %1159 = vmatprep.subr.mxu0 0.0
  %1160 = vmatpush2.msra.mxu0 0.0
  %1161 = vmatprep.subr.mxu0 0.0
  %1162 = vmatpush2.msra.mxu0 0.0
  %1163 = vmatprep.subr.mxu0 0.0
  %1164 = vmatpush2.msra.mxu0 0.0
  %1165 = vmatprep.subr.mxu0 0.0
  %1166 = vmatpush2.msra.mxu0 0.0
  %1167 = vmatprep.subr.mxu0 0.0
  %1168 = vmatpush2.msra.mxu0 0.0
  %1169 = vmatprep.mubr.f32.mxu0 0.0
  %v1170 = vand.u32 %v939, 4294901760
  %v1171 = vsub.f32 %v939, %v1170
  %1172 = vmatmul.mubr.f32.gmra.mxu0 %v1171
  %v1173 = vpop.f32.mrf.mxu0
  %v1174 = vadd.f32 %v1097, %v1173
  %v1175 = vpop.f32.mrf.mxu0
  %v1176 = vadd.f32 %v1099, %v1175
  %1177 = vdwg.mxu0
  %1178 = vmatprep.subr.mxu0 0.0
  %1179 = vmatpush1.msra.mxu0 0.0
  %1180 = vmatprep.subr.mxu0 0.0
  %1181 = vmatpush1.msra.mxu0 0.0
  %1182 = vmatprep.subr.mxu0 0.0
  %1183 = vmatpush1.msra.mxu0 0.0
  %1184 = vmatprep.subr.mxu0 0.0
  %1185 = vmatpush1.msra.mxu0 0.0
  %1186 = vmatprep.subr.mxu0 0.0
  %1187 = vmatpush1.msra.mxu0 0.0
  %1188 = vmatprep.subr.mxu0 0.0
  %1189 = vmatpush1.msra.mxu0 0.0
  %1190 = vmatprep.subr.mxu0 0.0
  %1191 = vmatpush1.msra.mxu0 0.0
  %1192 = vmatprep.subr.mxu0 0.0
  %1193 = vmatpush1.msra.mxu0 0.0
  %1194 = vmatprep.subr.mxu0 0.0
  %1195 = vmatpush1.msra.mxu0 0.0
  %1196 = vmatprep.subr.mxu0 0.0
  %1197 = vmatpush1.msra.mxu0 0.0
  %1198 = vmatprep.subr.mxu0 0.0
  %1199 = vmatpush1.msra.mxu0 0.0
  %1200 = vmatprep.subr.mxu0 0.0
  %1201 = vmatpush1.msra.mxu0 0.0
  %1202 = vmatprep.subr.mxu0 0.0
  %1203 = vmatpush1.msra.mxu0 0.0
  %1204 = vmatprep.subr.mxu0 0.0
  %1205 = vmatpush1.msra.mxu0 0.0
  %1206 = vmatprep.subr.mxu0 0.0
  %1207 = vmatpush1.msra.mxu0 0.0
  %v1208 = vand.u32 %v937, 4294901760
  %1209 = vmatprep.subr.mxu0 %v1208
  %v1210 = vand.u32 %v936, 4294901760
  %1211 = vmatpush1.msra.mxu0 %v1210
  %1212 = vmatprep.subr.mxu0 0.0
  %1213 = vmatpush2.msra.mxu0 0.0
  %1214 = vmatprep.subr.mxu0 0.0
  %1215 = vmatpush2.msra.mxu0 0.0
  %1216 = vmatprep.subr.mxu0 0.0
  %1217 = vmatpush2.msra.mxu0 0.0
  %1218 = vmatprep.subr.mxu0 0.0
  %1219 = vmatpush2.msra.mxu0 0.0
  %1220 = vmatprep.subr.mxu0 0.0
  %1221 = vmatpush2.msra.mxu0 0.0
  %1222 = vmatprep.subr.mxu0 0.0
  %1223 = vmatpush2.msra.mxu0 0.0
  %1224 = vmatprep.subr.mxu0 0.0
  %1225 = vmatpush2.msra.mxu0 0.0
  %1226 = vmatprep.subr.mxu0 0.0
  %1227 = vmatpush2.msra.mxu0 0.0
  %1228 = vmatprep.subr.mxu0 0.0
  %1229 = vmatpush2.msra.mxu0 0.0
  %1230 = vmatprep.subr.mxu0 0.0
  %1231 = vmatpush2.msra.mxu0 0.0
  %1232 = vmatprep.subr.mxu0 0.0
  %1233 = vmatpush2.msra.mxu0 0.0
  %1234 = vmatprep.subr.mxu0 0.0
  %1235 = vmatpush2.msra.mxu0 0.0
  %1236 = vmatprep.subr.mxu0 0.0
  %1237 = vmatpush2.msra.mxu0 0.0
  %1238 = vmatprep.subr.mxu0 0.0
  %1239 = vmatpush2.msra.mxu0 0.0
  %1240 = vmatprep.subr.mxu0 0.0
  %1241 = vmatpush2.msra.mxu0 0.0
  %1242 = vmatprep.subr.mxu0 0.0
  %1243 = vmatpush2.msra.mxu0 0.0
  %1244 = vmatprep.mubr.f32.mxu0 0.0
  %v1245 = vand.u32 %v939, 4294901760
  %v1246 = vsub.f32 %v939, %v1245
  %v1247 = vand.u32 %v1246, 4294901760
  %1248 = vmatmul.mubr.f32.gmra.mxu0 %v1247
  %v1249 = vpop.f32.mrf.mxu0
  %v1250 = vadd.f32 %v1174, %v1249
  %v1251 = vpop.f32.mrf.mxu0
  %v1252 = vadd.f32 %v1176, %v1251
  %1253 = vdwg.mxu0
  %1254 = vmatprep.subr.mxu0 0.0
  %1255 = vmatpush1.msra.mxu0 0.0
  %1256 = vmatprep.subr.mxu0 0.0
  %1257 = vmatpush1.msra.mxu0 0.0
  %1258 = vmatprep.subr.mxu0 0.0
  %1259 = vmatpush1.msra.mxu0 0.0
  %1260 = vmatprep.subr.mxu0 0.0
  %1261 = vmatpush1.msra.mxu0 0.0
  %1262 = vmatprep.subr.mxu0 0.0
  %1263 = vmatpush1.msra.mxu0 0.0
  %1264 = vmatprep.subr.mxu0 0.0
  %1265 = vmatpush1.msra.mxu0 0.0
  %1266 = vmatprep.subr.mxu0 0.0
  %1267 = vmatpush1.msra.mxu0 0.0
  %1268 = vmatprep.subr.mxu0 0.0
  %1269 = vmatpush1.msra.mxu0 0.0
  %1270 = vmatprep.subr.mxu0 0.0
  %1271 = vmatpush1.msra.mxu0 0.0
  %1272 = vmatprep.subr.mxu0 0.0
  %1273 = vmatpush1.msra.mxu0 0.0
  %1274 = vmatprep.subr.mxu0 0.0
  %1275 = vmatpush1.msra.mxu0 0.0
  %1276 = vmatprep.subr.mxu0 0.0
  %1277 = vmatpush1.msra.mxu0 0.0
  %1278 = vmatprep.subr.mxu0 0.0
  %1279 = vmatpush1.msra.mxu0 0.0
  %1280 = vmatprep.subr.mxu0 0.0
  %1281 = vmatpush1.msra.mxu0 0.0
  %1282 = vmatprep.subr.mxu0 0.0
  %1283 = vmatpush1.msra.mxu0 0.0
  %v1284 = vand.u32 %v937, 4294901760
  %v1285 = vsub.f32 %v937, %v1284
  %v1286 = vand.u32 %v1285, 4294901760
  %1287 = vmatprep.subr.mxu0 %v1286
  %v1288 = vand.u32 %v936, 4294901760
  %v1289 = vsub.f32 %v936, %v1288
  %v1290 = vand.u32 %v1289, 4294901760
  %1291 = vmatpush1.msra.mxu0 %v1290
  %1292 = vmatprep.subr.mxu0 0.0
  %1293 = vmatpush2.msra.mxu0 0.0
  %1294 = vmatprep.subr.mxu0 0.0
  %1295 = vmatpush2.msra.mxu0 0.0
  %1296 = vmatprep.subr.mxu0 0.0
  %1297 = vmatpush2.msra.mxu0 0.0
  %1298 = vmatprep.subr.mxu0 0.0
  %1299 = vmatpush2.msra.mxu0 0.0
  %1300 = vmatprep.subr.mxu0 0.0
  %1301 = vmatpush2.msra.mxu0 0.0
  %1302 = vmatprep.subr.mxu0 0.0
  %1303 = vmatpush2.msra.mxu0 0.0
  %1304 = vmatprep.subr.mxu0 0.0
  %1305 = vmatpush2.msra.mxu0 0.0
  %1306 = vmatprep.subr.mxu0 0.0
  %1307 = vmatpush2.msra.mxu0 0.0
  %1308 = vmatprep.subr.mxu0 0.0
  %1309 = vmatpush2.msra.mxu0 0.0
  %1310 = vmatprep.subr.mxu0 0.0
  %1311 = vmatpush2.msra.mxu0 0.0
  %1312 = vmatprep.subr.mxu0 0.0
  %1313 = vmatpush2.msra.mxu0 0.0
  %1314 = vmatprep.subr.mxu0 0.0
  %1315 = vmatpush2.msra.mxu0 0.0
  %1316 = vmatprep.subr.mxu0 0.0
  %1317 = vmatpush2.msra.mxu0 0.0
  %1318 = vmatprep.subr.mxu0 0.0
  %1319 = vmatpush2.msra.mxu0 0.0
  %1320 = vmatprep.subr.mxu0 0.0
  %1321 = vmatpush2.msra.mxu0 0.0
  %1322 = vmatprep.subr.mxu0 0.0
  %1323 = vmatpush2.msra.mxu0 0.0
  %1324 = vmatprep.mubr.f32.mxu0 0.0
  %v1325 = vand.u32 %v939, 4294901760
  %1326 = vmatmul.mubr.f32.gmra.mxu0 %v1325
  %v1327 = vpop.f32.mrf.mxu0
  %v1328 = vadd.f32 %v1250, %v1327
  %v1329 = vpop.f32.mrf.mxu0
  %v1330 = vadd.f32 %v1252, %v1329
  %1331 = vdwg.mxu0
  %1332 = vmatprep.subr.mxu0 0.0
  %1333 = vmatpush1.msra.mxu0 0.0
  %1334 = vmatprep.subr.mxu0 0.0
  %1335 = vmatpush1.msra.mxu0 0.0
  %1336 = vmatprep.subr.mxu0 0.0
  %1337 = vmatpush1.msra.mxu0 0.0
  %1338 = vmatprep.subr.mxu0 0.0
  %1339 = vmatpush1.msra.mxu0 0.0
  %1340 = vmatprep.subr.mxu0 0.0
  %1341 = vmatpush1.msra.mxu0 0.0
  %1342 = vmatprep.subr.mxu0 0.0
  %1343 = vmatpush1.msra.mxu0 0.0
  %1344 = vmatprep.subr.mxu0 0.0
  %1345 = vmatpush1.msra.mxu0 0.0
  %1346 = vmatprep.subr.mxu0 0.0
  %1347 = vmatpush1.msra.mxu0 0.0
  %1348 = vmatprep.subr.mxu0 0.0
  %1349 = vmatpush1.msra.mxu0 0.0
  %1350 = vmatprep.subr.mxu0 0.0
  %1351 = vmatpush1.msra.mxu0 0.0
  %1352 = vmatprep.subr.mxu0 0.0
  %1353 = vmatpush1.msra.mxu0 0.0
  %1354 = vmatprep.subr.mxu0 0.0
  %1355 = vmatpush1.msra.mxu0 0.0
  %1356 = vmatprep.subr.mxu0 0.0
  %1357 = vmatpush1.msra.mxu0 0.0
  %1358 = vmatprep.subr.mxu0 0.0
  %1359 = vmatpush1.msra.mxu0 0.0
  %1360 = vmatprep.subr.mxu0 0.0
  %1361 = vmatpush1.msra.mxu0 0.0
  %v1362 = vand.u32 %v937, 4294901760
  %1363 = vmatprep.subr.mxu0 %v1362
  %v1364 = vand.u32 %v936, 4294901760
  %1365 = vmatpush1.msra.mxu0 %v1364
  %1366 = vmatprep.subr.mxu0 0.0
  %1367 = vmatpush2.msra.mxu0 0.0
  %1368 = vmatprep.subr.mxu0 0.0
  %1369 = vmatpush2.msra.mxu0 0.0
  %1370 = vmatprep.subr.mxu0 0.0
  %1371 = vmatpush2.msra.mxu0 0.0
  %1372 = vmatprep.subr.mxu0 0.0
  %1373 = vmatpush2.msra.mxu0 0.0
  %1374 = vmatprep.subr.mxu0 0.0
  %1375 = vmatpush2.msra.mxu0 0.0
  %1376 = vmatprep.subr.mxu0 0.0
  %1377 = vmatpush2.msra.mxu0 0.0
  %1378 = vmatprep.subr.mxu0 0.0
  %1379 = vmatpush2.msra.mxu0 0.0
  %1380 = vmatprep.subr.mxu0 0.0
  %1381 = vmatpush2.msra.mxu0 0.0
  %1382 = vmatprep.subr.mxu0 0.0
  %1383 = vmatpush2.msra.mxu0 0.0
  %1384 = vmatprep.subr.mxu0 0.0
  %1385 = vmatpush2.msra.mxu0 0.0
  %1386 = vmatprep.subr.mxu0 0.0
  %1387 = vmatpush2.msra.mxu0 0.0
  %1388 = vmatprep.subr.mxu0 0.0
  %1389 = vmatpush2.msra.mxu0 0.0
  %1390 = vmatprep.subr.mxu0 0.0
  %1391 = vmatpush2.msra.mxu0 0.0
  %1392 = vmatprep.subr.mxu0 0.0
  %1393 = vmatpush2.msra.mxu0 0.0
  %1394 = vmatprep.subr.mxu0 0.0
  %1395 = vmatpush2.msra.mxu0 0.0
  %1396 = vmatprep.subr.mxu0 0.0
  %1397 = vmatpush2.msra.mxu0 0.0
  %1398 = vmatprep.mubr.f32.mxu0 0.0
  %v1399 = vand.u32 %v939, 4294901760
  %1400 = vmatmul.mubr.f32.gmra.mxu0 %v1399
  %v1401 = vpop.f32.mrf.mxu0
  %v1402 = vadd.f32 %v1328, %v1401
  %v1403 = vpop.f32.mrf.mxu0
  %v1404 = vadd.f32 %v1330, %v1403
  %1405 = vdwg.mxu0
  %v1406 = vadd.f32 %v14, %v1402
  %v1407 = vadd.f32 %v15, %v1404
  %v1408 = vld [vmem:[%s2] sm:$0xff]
  %1410 = vset.pattern.permute.xlu0 0
  %1411 = vperm.xlu0 %1410, %v1408
  %v1412 = vpop.permute.xlu0 %1411
  %v1414 = vadd.f32 %v1406, %v1412
  %v1415 = vadd.f32 %v1407, %v1412
  %1416 = vst [vmem:[%s3] sm:$0xff] %v1414
  %1417 = vst [vmem:[%s3 + $0x8] sm:$0xff] %v1415
  // Predicated region
  $region14: #{multihead_attn.1} parent=0 // pred_check
    _
  $region15: #{multihead_attn.1} parent=0 // pred_check_branch
    %1419 = sbr.rel (0) target = $region17
  $region16: #{multihead_attn.1} parent=0 // pred_region
    _
  $region17: #{multihead_attn.1} parent=0 // pred_fallthru
    _
  // Predicated region
  $region18: #{multihead_attn.1} parent=0 // pred_check
    _
  $region19: #{multihead_attn.1} parent=0 // pred_check_branch
    %1421 = sbr.rel (0) target = $region21
  $region20: #{multihead_attn.1} parent=0 // pred_region
    _
  $region21: #{multihead_attn.1} parent=0 // pred_fallthru
    _

</llo_original>
